<compile_context>
chip_gen: v5e
topology: v5e:2x2
jax: 0.10.0
libtpu: 0.0.40
codegen_flags: <defaults>
</compile_context>

<pallas_src>
import jax
import jax.numpy as jnp
from jax.experimental import pallas as pl
from jax.experimental.pallas import tpu as pltpu


def _semantic_att_kernel(sem_ref, q_ref, cur_ref,
                         wq_ref, bq_ref,
                         wp_ref, bp_ref,
                         wc_ref, bc_ref,
                         wa_ref,
                         o_ref):
    # Block shapes are static: (TB, N, E) semantic tile per grid step.
    TB, N, E = sem_ref.shape

    sem = sem_ref[...]                     # (TB, N, E)
    sem2 = sem.reshape(TB * N, E)          # rows for the MXU

    # F.relu(semantic_q(q))        -> (TB, E)
    q_proj = jnp.maximum(
        jnp.dot(q_ref[...], wq_ref[...], preferred_element_type=jnp.float32)
        + bq_ref[...], 0.0)
    # F.relu(semantic_cur(cur_v))  -> (TB, E)
    v_cur = jnp.maximum(
        jnp.dot(cur_ref[...], wc_ref[...], preferred_element_type=jnp.float32)
        + bc_ref[...], 0.0)
    # F.relu(semantic_pool(sem))   -> (TB*N, E)   (big MXU matmul)
    v_pool = jnp.maximum(
        jnp.dot(sem2, wp_ref[...], preferred_element_type=jnp.float32)
        + bp_ref[...], 0.0)

    # Broadcast-add (torch expand_as): (TB, N, E)
    h = v_pool.reshape(TB, N, E) + (q_proj + v_cur)[:, None, :]

    # semantic_att projection to one logit per row, lane-major scores (TB, N).
    # The degenerate (E, 1) matmul becomes a VPU multiply + lane reduce over E.
    # NOTE: the attention bias `ba` is cancelled by the softmax, so it is
    # dropped here (no DMA, no add).
    scores = jnp.sum(h * wa_ref[...], axis=-1)          # (TB, N), N on lanes

    # softmax over N (lane axis); denominator reciprocal on the EUP.
    m = jnp.max(scores, axis=-1, keepdims=True)         # (TB, 1)
    e = jnp.exp(scores - m)                              # (TB, N)
    denom = jnp.sum(e, axis=-1, keepdims=True)           # (TB, 1)
    att = e * pl.reciprocal(denom, approx=True)          # (TB, N)

    # Weighted sum over the N semantic vectors as a batched contraction
    # (same form as the flash-attention 'bqk,bkd->bqd' matmul, with q == 1),
    # producing a lane-dense (TB, E) output block.
    out = jnp.einsum('bqn,bne->bqe', att[:, None, :], sem,
                     preferred_element_type=jnp.float32)  # (TB, 1, E)
    o_ref[...] = out.reshape(TB, E).astype(o_ref.dtype)


def _round_up(x, m):
    return ((x + m - 1) // m) * m


def _choose_batch_tile(B, N):
    """Batch-tile size: a multiple of 8 (sublane-aligned (TB, E) blocks),
    aiming for ~256 LHS rows per pool matmul (fills a v6e/v7x 256-wide MXU
    pass; a multiple of 128 for v5e), and >= 2 grid tiles when B allows so
    v7x's two TensorCores both get work."""
    tb = _round_up(max(1, pl.cdiv(256, max(N, 1))), 8)
    tb = min(tb, _round_up(B, 8))
    if _round_up(B, tb) // tb < 2:
        half = _round_up(pl.cdiv(B, 2), 8)
        if half < tb:
            tb = half
    return tb


def semantic_att_forward(semantic, q, cur_v, params, *, batch_tile=None):
    """semantic: (B,N,E), q: (B,E), cur_v: (B,E) -> (B,E)."""
    B, N, E = semantic.shape
    wq, bq, wp, bp, wc, bc, wa, ba = params
    del ba  # softmax(x + c) == softmax(x): the attention bias cancels exactly.

    tb = batch_tile if batch_tile is not None else _choose_batch_tile(B, N)
    Bp = _round_up(B, tb)
    if Bp != B:
        pad = Bp - B
        semantic = jnp.pad(semantic, ((0, pad), (0, 0), (0, 0)))
        q = jnp.pad(q, ((0, pad), (0, 0)))
        cur_v = jnp.pad(cur_v, ((0, pad), (0, 0)))

    bq2 = bq.reshape(1, E)
    bp2 = bp.reshape(1, E)
    bc2 = bc.reshape(1, E)
    wa_row = wa.reshape(1, E)   # (E,1) column -> (1,E) row for the VPU dot

    w_spec = pl.BlockSpec((E, E), lambda b: (0, 0))
    b_spec = pl.BlockSpec((1, E), lambda b: (0, 0))
    # NOTE: for large E (>= 1024) on v7x (64 MiB VMEM), the constant-index
    # weight blocks should be single-buffered (pipeline_mode=pl.Buffered(1))
    # or staged once into scratch VMEM; unnecessary at small E.

    out = pl.pallas_call(
        _semantic_att_kernel,
        out_shape=jax.ShapeDtypeStruct((Bp, E), jnp.float32),
        grid=(Bp // tb,),
        in_specs=[
            pl.BlockSpec((tb, N, E), lambda b: (b, 0, 0)),   # semantic
            pl.BlockSpec((tb, E), lambda b: (b, 0)),         # q
            pl.BlockSpec((tb, E), lambda b: (b, 0)),         # cur_v
            w_spec, b_spec,                                  # Wq, bq
            w_spec, b_spec,                                  # Wp, bp
            w_spec, b_spec,                                  # Wc, bc
            pl.BlockSpec((1, E), lambda b: (0, 0)),          # Wa as (1, E) row
        ],
        out_specs=pl.BlockSpec((tb, E), lambda b: (b, 0)),
        compiler_params=pltpu.CompilerParams(
            dimension_semantics=("parallel",)),
    )(semantic, q, cur_v, wq, bq2, wp, bp2, wc, bc2, wa_row)

    return out[:B]


def _ref_forward(semantic, q, cur_v, params):
    """Pure-JAX reference mirroring the PyTorch forward."""
    wq, bq, wp, bp, wc, bc, wa, ba = params
    q_proj = jax.nn.relu(q @ wq + bq)[:, None, :]            # (B,1,E)
    v_pool = jax.nn.relu(semantic @ wp + bp)                 # (B,N,E)
    v_cur = jax.nn.relu(cur_v @ wc + bc)[:, None, :]         # (B,1,E)
    scores = (q_proj + v_pool + v_cur) @ wa + ba             # (B,N,1)
    att = jax.nn.softmax(scores, axis=1)                     # (B,N,1)
    return jnp.sum(att * semantic, axis=1)                   # (B,E)


def init_params(key, E):
    """Deterministic synthetic parameters (shapes match nn.Linear layers)."""
    ks = jax.random.split(key, 8)
    s = 0.1
    wq = s * jax.random.normal(ks[0], (E, E), jnp.float32)
    bq = s * jax.random.normal(ks[1], (E,), jnp.float32)
    wp = s * jax.random.normal(ks[2], (E, E), jnp.float32)
    bp = s * jax.random.normal(ks[3], (E,), jnp.float32)
    wc = s * jax.random.normal(ks[4], (E, E), jnp.float32)
    bc = s * jax.random.normal(ks[5], (E,), jnp.float32)
    wa = s * jax.random.normal(ks[6], (E, 1), jnp.float32)
    ba = s * jax.random.normal(ks[7], (1,), jnp.float32)
    return (wq, bq, wp, bp, wc, bc, wa, ba)


if __name__ == "__main__":
    # Small shapes consistent with semantic_att(embedding_size=E); B=12 also
    # exercises batch padding (Bp=16) and a 2-tile grid (TB=8).
    B, N, E = 12, 8, 32

    key = jax.random.PRNGKey(0)
    k_sem, k_q, k_cur, k_par = jax.random.split(key, 4)
    semantic = jax.random.normal(k_sem, (B, N, E), jnp.float32)
    q = jax.random.normal(k_q, (B, E), jnp.float32)
    cur_v = jax.random.normal(k_cur, (B, E), jnp.float32)
    params = init_params(k_par, E)

    out = semantic_att_forward(semantic, q, cur_v, params)
    out = jax.block_until_ready(out)

    ref = _ref_forward(semantic, q, cur_v, params)
    assert out.shape == (B, E)
    # Tolerance relaxed slightly because the softmax denominator uses the
    # EUP approximate reciprocal (~2^-12 relative error).
    assert jnp.allclose(out, ref, atol=2e-3, rtol=2e-3), "mismatch vs reference"

    print("KERNEL_OK")
</pallas_src>

<mosaic_0001>
module attributes {stable_mosaic.version = 11 : i64} {
  func.func @_semantic_att_kernel(%arg0: i32, %arg1: memref<8x8x32xf32, #tpu.memory_space<vmem>>, %arg2: memref<8x32xf32, #tpu.memory_space<vmem>>, %arg3: memref<8x32xf32, #tpu.memory_space<vmem>>, %arg4: memref<32x32xf32, #tpu.memory_space<vmem>>, %arg5: memref<1x32xf32, #tpu.memory_space<vmem>>, %arg6: memref<32x32xf32, #tpu.memory_space<vmem>>, %arg7: memref<1x32xf32, #tpu.memory_space<vmem>>, %arg8: memref<32x32xf32, #tpu.memory_space<vmem>>, %arg9: memref<1x32xf32, #tpu.memory_space<vmem>>, %arg10: memref<1x32xf32, #tpu.memory_space<vmem>>, %arg11: memref<8x32xf32, #tpu.memory_space<vmem>>) attributes {dimension_semantics = [#tpu.dimension_semantics<parallel>], iteration_bounds = array<i64: 2>, scalar_prefetch = 0 : i64, scratch_operands = 0 : i64, tpu.core_type = #tpu.core_type<tc>, window_params = [{transform_indices = @transform_0, window_bounds = array<i64: 8, 8, 32>}, {transform_indices = @transform_1, window_bounds = array<i64: 8, 32>}, {transform_indices = @transform_2, window_bounds = array<i64: 8, 32>}, {pipeline_mode = #tpu.pipeline_mode<synchronous>, transform_indices = @transform_3, window_bounds = array<i64: 32, 32>}, {pipeline_mode = #tpu.pipeline_mode<synchronous>, transform_indices = @transform_4, window_bounds = array<i64: 1, 32>}, {pipeline_mode = #tpu.pipeline_mode<synchronous>, transform_indices = @transform_5, window_bounds = array<i64: 32, 32>}, {pipeline_mode = #tpu.pipeline_mode<synchronous>, transform_indices = @transform_6, window_bounds = array<i64: 1, 32>}, {pipeline_mode = #tpu.pipeline_mode<synchronous>, transform_indices = @transform_7, window_bounds = array<i64: 32, 32>}, {pipeline_mode = #tpu.pipeline_mode<synchronous>, transform_indices = @transform_8, window_bounds = array<i64: 1, 32>}, {pipeline_mode = #tpu.pipeline_mode<synchronous>, transform_indices = @transform_9, window_bounds = array<i64: 1, 32>}, {transform_indices = @transform_10, window_bounds = array<i64: 8, 32>}]} {
    %c0 = arith.constant 0 : index
    %c0_0 = arith.constant 0 : index
    %c0_1 = arith.constant 0 : index
    %0 = vector.load %arg1[%c0, %c0_0, %c0_1] : memref<8x8x32xf32, #tpu.memory_space<vmem>>, vector<8x8x32xf32>
    %1 = vector.shape_cast %0 : vector<8x8x32xf32> to vector<64x32xf32>
    %c0_2 = arith.constant 0 : index
    %c0_3 = arith.constant 0 : index
    %2 = vector.load %arg2[%c0_2, %c0_3] : memref<8x32xf32, #tpu.memory_space<vmem>>, vector<8x32xf32>
    %c0_4 = arith.constant 0 : index
    %c0_5 = arith.constant 0 : index
    %3 = vector.load %arg4[%c0_4, %c0_5] : memref<32x32xf32, #tpu.memory_space<vmem>>, vector<32x32xf32>
    %cst = arith.constant dense<0.000000e+00> : vector<8x32xf32>
    %4 = tpu.matmul %2, %3, %cst {dimension_numbers = #tpu.dot_dimension_numbers<[1], [0], [0], [1], [0, 0, 1, 1], [], []>} : vector<8x32xf32>, vector<32x32xf32>, vector<8x32xf32> -> vector<8x32xf32>
    %c0_6 = arith.constant 0 : index
    %c0_7 = arith.constant 0 : index
    %5 = vector.load %arg5[%c0_6, %c0_7] : memref<1x32xf32, #tpu.memory_space<vmem>>, vector<1x32xf32>
    %6 = vector.broadcast %5 : vector<1x32xf32> to vector<8x32xf32>
    %7 = arith.addf %4, %6 : vector<8x32xf32>
    %cst_8 = arith.constant 0.000000e+00 : f32
    %8 = vector.broadcast %cst_8 : f32 to vector<8x32xf32>
    %9 = arith.maximumf %7, %8 : vector<8x32xf32>
    %c0_9 = arith.constant 0 : index
    %c0_10 = arith.constant 0 : index
    %10 = vector.load %arg3[%c0_9, %c0_10] : memref<8x32xf32, #tpu.memory_space<vmem>>, vector<8x32xf32>
    %c0_11 = arith.constant 0 : index
    %c0_12 = arith.constant 0 : index
    %11 = vector.load %arg8[%c0_11, %c0_12] : memref<32x32xf32, #tpu.memory_space<vmem>>, vector<32x32xf32>
    %cst_13 = arith.constant dense<0.000000e+00> : vector<8x32xf32>
    %12 = tpu.matmul %10, %11, %cst_13 {dimension_numbers = #tpu.dot_dimension_numbers<[1], [0], [0], [1], [0, 0, 1, 1], [], []>} : vector<8x32xf32>, vector<32x32xf32>, vector<8x32xf32> -> vector<8x32xf32>
    %c0_14 = arith.constant 0 : index
    %c0_15 = arith.constant 0 : index
    %13 = vector.load %arg9[%c0_14, %c0_15] : memref<1x32xf32, #tpu.memory_space<vmem>>, vector<1x32xf32>
    %14 = vector.broadcast %13 : vector<1x32xf32> to vector<8x32xf32>
    %15 = arith.addf %12, %14 : vector<8x32xf32>
    %cst_16 = arith.constant 0.000000e+00 : f32
    %16 = vector.broadcast %cst_16 : f32 to vector<8x32xf32>
    %17 = arith.maximumf %15, %16 : vector<8x32xf32>
    %c0_17 = arith.constant 0 : index
    %c0_18 = arith.constant 0 : index
    %18 = vector.load %arg6[%c0_17, %c0_18] : memref<32x32xf32, #tpu.memory_space<vmem>>, vector<32x32xf32>
    %cst_19 = arith.constant dense<0.000000e+00> : vector<64x32xf32>
    %19 = tpu.matmul %1, %18, %cst_19 {dimension_numbers = #tpu.dot_dimension_numbers<[1], [0], [0], [1], [0, 0, 1, 1], [], []>} : vector<64x32xf32>, vector<32x32xf32>, vector<64x32xf32> -> vector<64x32xf32>
    %c0_20 = arith.constant 0 : index
    %c0_21 = arith.constant 0 : index
    %20 = vector.load %arg7[%c0_20, %c0_21] : memref<1x32xf32, #tpu.memory_space<vmem>>, vector<1x32xf32>
    %21 = vector.broadcast %20 : vector<1x32xf32> to vector<64x32xf32>
    %22 = arith.addf %19, %21 : vector<64x32xf32>
    %cst_22 = arith.constant 0.000000e+00 : f32
    %23 = vector.broadcast %cst_22 : f32 to vector<64x32xf32>
    %24 = arith.maximumf %22, %23 : vector<64x32xf32>
    %25 = vector.shape_cast %24 : vector<64x32xf32> to vector<8x8x32xf32>
    %26 = arith.addf %9, %17 : vector<8x32xf32>
    %27 = vector.shape_cast %26 : vector<8x32xf32> to vector<8x1x32xf32>
    %28 = vector.broadcast %27 : vector<8x1x32xf32> to vector<8x8x32xf32>
    %29 = arith.addf %25, %28 : vector<8x8x32xf32>
    %c0_23 = arith.constant 0 : index
    %c0_24 = arith.constant 0 : index
    %30 = vector.load %arg10[%c0_23, %c0_24] : memref<1x32xf32, #tpu.memory_space<vmem>>, vector<1x32xf32>
    %31 = vector.shape_cast %30 : vector<1x32xf32> to vector<1x1x32xf32>
    %32 = vector.broadcast %31 : vector<1x1x32xf32> to vector<8x8x32xf32>
    %33 = arith.mulf %29, %32 : vector<8x8x32xf32>
    %cst_25 = arith.constant dense<0.000000e+00> : vector<8x8xf32>
    %34 = vector.multi_reduction <add>, %33, %cst_25 [2] : vector<8x8x32xf32> to vector<8x8xf32>
    %cst_26 = arith.constant dense<0xFF800000> : vector<8xf32>
    %35 = vector.multi_reduction <maximumf>, %34, %cst_26 [1] : vector<8x8xf32> to vector<8xf32>
    %36 = vector.shape_cast %35 : vector<8xf32> to vector<8x1xf32>
    %37 = vector.broadcast %36 : vector<8x1xf32> to vector<8x8xf32>
    %38 = arith.subf %34, %37 : vector<8x8xf32>
    %39 = math.exp %38 : vector<8x8xf32>
    %cst_27 = arith.constant dense<0.000000e+00> : vector<8xf32>
    %40 = vector.multi_reduction <add>, %39, %cst_27 [1] : vector<8x8xf32> to vector<8xf32>
    %41 = vector.shape_cast %40 : vector<8xf32> to vector<8x1xf32>
    %42 = tpu.reciprocal %41 {approx = true} : vector<8x1xf32> -> vector<8x1xf32>
    %43 = vector.broadcast %42 : vector<8x1xf32> to vector<8x8xf32>
    %44 = arith.mulf %39, %43 : vector<8x8xf32>
    %45 = vector.shape_cast %44 : vector<8x8xf32> to vector<8x1x8xf32>
    "tpu.trace_start"() <{level = 10 : i32, message = "bqn,bne->bqe"}> : () -> ()
    %cst_28 = arith.constant dense<0.000000e+00> : vector<8x1x32xf32>
    %46 = tpu.matmul %45, %0, %cst_28 {dimension_numbers = #tpu.dot_dimension_numbers<[2], [1], [1], [2], [0, 0, 0, 1, 1, 2], [0], [0]>} : vector<8x1x8xf32>, vector<8x8x32xf32>, vector<8x1x32xf32> -> vector<8x1x32xf32>
    "tpu.trace_stop"() : () -> ()
    %47 = vector.shape_cast %46 : vector<8x1x32xf32> to vector<8x32xf32>
    %c0_29 = arith.constant 0 : index
    %c0_30 = arith.constant 0 : index
    %48 = vector.load %arg11[%c0_29, %c0_30] : memref<8x32xf32, #tpu.memory_space<vmem>>, vector<8x32xf32>
    tpu.vector_store %arg11[%c0_29, %c0_30], %47 {strides = array<i32>} : memref<8x32xf32, #tpu.memory_space<vmem>>, vector<8x32xf32>,
    return
  }
  func.func @transform_0(%arg0: i32) -> (i32, i32, i32) {
    %c0_i32 = arith.constant 0 : i32
    %c0_i32_0 = arith.constant 0 : i32
    %c0_i32_1 = arith.constant 0 : i32
    return %arg0, %c0_i32, %c0_i32_0 : i32, i32, i32
  }
  func.func @transform_1(%arg0: i32) -> (i32, i32) {
    %c0_i32 = arith.constant 0 : i32
    %c0_i32_0 = arith.constant 0 : i32
    return %arg0, %c0_i32 : i32, i32
  }
  func.func @transform_2(%arg0: i32) -> (i32, i32) {
    %c0_i32 = arith.constant 0 : i32
    %c0_i32_0 = arith.constant 0 : i32
    return %arg0, %c0_i32 : i32, i32
  }
  func.func @transform_3(%arg0: i32) -> (i32, i32) {
    %c0_i32 = arith.constant 0 : i32
    %c0_i32_0 = arith.constant 0 : i32
    %c0_i32_1 = arith.constant 0 : i32
    return %c0_i32, %c0_i32_0 : i32, i32
  }
  func.func @transform_4(%arg0: i32) -> (i32, i32) {
    %c0_i32 = arith.constant 0 : i32
    %c0_i32_0 = arith.constant 0 : i32
    %c0_i32_1 = arith.constant 0 : i32
    return %c0_i32, %c0_i32_0 : i32, i32
  }
  func.func @transform_5(%arg0: i32) -> (i32, i32) {
    %c0_i32 = arith.constant 0 : i32
    %c0_i32_0 = arith.constant 0 : i32
    %c0_i32_1 = arith.constant 0 : i32
    return %c0_i32, %c0_i32_0 : i32, i32
  }
  func.func @transform_6(%arg0: i32) -> (i32, i32) {
    %c0_i32 = arith.constant 0 : i32
    %c0_i32_0 = arith.constant 0 : i32
    %c0_i32_1 = arith.constant 0 : i32
    return %c0_i32, %c0_i32_0 : i32, i32
  }
  func.func @transform_7(%arg0: i32) -> (i32, i32) {
    %c0_i32 = arith.constant 0 : i32
    %c0_i32_0 = arith.constant 0 : i32
    %c0_i32_1 = arith.constant 0 : i32
    return %c0_i32, %c0_i32_0 : i32, i32
  }
  func.func @transform_8(%arg0: i32) -> (i32, i32) {
    %c0_i32 = arith.constant 0 : i32
    %c0_i32_0 = arith.constant 0 : i32
    %c0_i32_1 = arith.constant 0 : i32
    return %c0_i32, %c0_i32_0 : i32, i32
  }
  func.func @transform_9(%arg0: i32) -> (i32, i32) {
    %c0_i32 = arith.constant 0 : i32
    %c0_i32_0 = arith.constant 0 : i32
    %c0_i32_1 = arith.constant 0 : i32
    return %c0_i32, %c0_i32_0 : i32, i32
  }
  func.func @transform_10(%arg0: i32) -> (i32, i32) {
    %c0_i32 = arith.constant 0 : i32
    %c0_i32_0 = arith.constant 0 : i32
    return %arg0, %c0_i32 : i32, i32
  }
}

</mosaic_0001>

<llo_original>
// kernel: tpu_custom_call.1
$region0: #{tpu_custom_call.1}
  #allocation0 [shape = 'u32[]', space=smem, size = 0x4, offset = 0x4, fixed_abs, tag = 'smem constant byte address 0x4 - core index']
  #allocation1 [shape = 'u32[72,128]{1,0:T(1,128)}', space=vmem, size = 0x9000, scoped, tag = 'internal scratch']
  %s0 = inlined_call_operand.hbm [shape: f32[16,8,32], index: 0, kind: input, shape index: {}]
  %s1 = inlined_call_operand.hbm [shape: f32[16,32], index: 1, kind: input, shape index: {}]
  %s2 = inlined_call_operand.hbm [shape: f32[16,32], index: 2, kind: input, shape index: {}]
  %s3 = inlined_call_operand.hbm [shape: f32[32,32], index: 3, kind: input, shape index: {}]
  %s4 = inlined_call_operand.vmem [shape: f32[1,32], index: 4, kind: input, shape index: {}]
  %s5 = inlined_call_operand.hbm [shape: f32[32,32], index: 5, kind: input, shape index: {}]
  %s6 = inlined_call_operand.vmem [shape: f32[1,32], index: 6, kind: input, shape index: {}]
  %s7 = inlined_call_operand.hbm [shape: f32[32,32], index: 7, kind: input, shape index: {}]
  %s8 = inlined_call_operand.vmem [shape: f32[1,32], index: 8, kind: input, shape index: {}]
  %s9 = inlined_call_operand.vmem [shape: f32[1,32], index: 9, kind: input, shape index: {}]
  %s10 = inlined_call_operand.hbm [shape: f32[16,32], index: 10, kind: output, shape index: {}]
  %s11 = sld [smem:[#allocation0]]
  $region97: #{tpu_custom_call.1} parent=0
    _
  %s13 = ssub.s32 1, %s11
  %s14 = scalar_select 0, %s13, %s11
  $region1: #{tpu_custom_call.1} parent=0
    #allocation2 [shape = 'u8[65536]{0}', space=vmem, size = 0x10000, scoped, tag = 'input window, operand 0']
    #allocation3 [shape = 's32[2]{0}', space=sflag, size = 0x8, scoped, tag = 'scoped memory for tpu_custom_call.1']
    #allocation4 [shape = 's32[2]{0}', space=sflag, size = 0x8, scoped, tag = 'scoped memory for tpu_custom_call.1']
    #allocation5 [shape = 'u8[8192]{0}', space=vmem, size = 0x2000, scoped, tag = 'input window, operand 1']
    #allocation6 [shape = 's32[2]{0}', space=sflag, size = 0x8, scoped, tag = 'scoped memory for tpu_custom_call.1']
    #allocation7 [shape = 'u8[8192]{0}', space=vmem, size = 0x2000, scoped, tag = 'input window, operand 2']
    #allocation8 [shape = 'u8[16384]{0}', space=vmem, size = 0x4000, scoped, tag = 'input window, operand 3, single buffered']
    #allocation9 [shape = 's32[1]{0}', space=sflag, size = 0x4, scoped, tag = 'scoped memory for tpu_custom_call.1']
    #allocation10 [shape = 'u8[16384]{0}', space=vmem, size = 0x4000, scoped, tag = 'input window, operand 5, single buffered']
    #allocation11 [shape = 'u8[16384]{0}', space=vmem, size = 0x4000, scoped, tag = 'input window, operand 7, single buffered']
    #allocation12 [shape = 's32[1]{0}', space=sflag, size = 0x4, scoped, tag = 'scoped memory for tpu_custom_call.1']
    #allocation13 [shape = 'u8[8192]{0}', space=vmem, size = 0x2000, scoped, tag = 'output window, operand 0']
    %15 = vsyncpa [#allocation3], 0
    %s16 = scalar_lea.sflag [#allocation3], 1
    %17 = vsyncpa %s16, 0
    %18 = vsyncpa [#allocation6], 0
    %s19 = scalar_lea.sflag [#allocation6], 1
    %20 = vsyncpa %s19, 0
    %21 = vsyncpa [#allocation9], 0
    %22 = vsyncpa [#allocation12], 0
    %23 = vsyncpa [#allocation4], 0
    %s24 = scalar_lea.sflag [#allocation4], 1
    %25 = vsyncpa %s24, 0
    loop: start=0, step=1, limit=4
    $region2: #{tpu_custom_call.1} parent=1 // loop_pre_header
      _
    $region3: #{tpu_custom_call.1} parent=1 // loop_header
      %s27 = sphi 0, %s31
      %p28 = scmp.ge.s32.totalorder %s27, 4
      %s37 = sphi 0, %s39
      %s40 = sphi 0, %s37
      %s41 = sphi 0, %s40
      %s57 = sphi 0, %s41
      %s63 = sphi 0, %s65
      %s66 = sphi 0, %s63
      %s67 = sphi 0, %s66
      %s83 = sphi 0, %s67
      %s89 = sphi 0, %s91
      %s92 = sphi 0, %s89
      %s93 = sphi 0, %s92
      %s109 = sphi 0, %s93
      %s113 = sphi 0, %s113
      %s115 = sphi 0, %s113
      %s116 = sphi 0, %s115
      %s130 = sphi 0, %s116
      %s134 = sphi 0, %s134
      %s136 = sphi 0, %s134
      %s137 = sphi 0, %s136
      %s151 = sphi 0, %s137
      %s155 = sphi 0, %s155
      %s157 = sphi 0, %s155
      %s158 = sphi 0, %s157
      %s172 = sphi 0, %s158
      %s176 = sphi 0, %s176
      %s178 = sphi 0, %s176
      %s179 = sphi 0, %s178
      %s193 = sphi 0, %s179
      %s197 = sphi 0, %s197
      %s199 = sphi 0, %s197
      %s200 = sphi 0, %s199
      %s214 = sphi 0, %s200
      %s218 = sphi 0, %s218
      %s220 = sphi 0, %s218
      %s221 = sphi 0, %s220
      %s235 = sphi 0, %s221
      %s239 = sphi 0, %s239
      %s241 = sphi 0, %s239
      %s242 = sphi 0, %s241
      %s256 = sphi 0, %s242
      %s262 = sphi 0, %s264
      %s265 = sphi 0, %s262
      %s266 = sphi 0, %s265
      %s282 = sphi 0, %s266
    $region4: #{tpu_custom_call.1} parent=1 // loop_header_branch
      %30 = sbr.rel (%p28) target = $region8
    $region5: #{tpu_custom_call.1} parent=1 // loop_body
      %s32 = ssub.s32 %s27, 1
      %s33 = ssub.s32 %s27, 2
      %s34 = sadd.s32 %s27, 1
      %s35 = ssub.s32 %s27, %s34
      %p36 = scmp.eq.s32.totalorder %s35, 0
      %s38 = sadd.s32 %s37, 1
      %s39 = scalar_select %p36, %s37, %s38
      %p42 = pneg %p36
      %p43 = scmp.eq.s32.totalorder %s27, 1
      %p44 = por %p42, %p43
      %p45 = scmp.ne.s32.totalorder %s37, %s40
      %p46 = scmp.eq.s32.totalorder %s27, 0
      %p47 = por %p45, %p46
      %p48 = scmp.ne.s32.totalorder %s37, %s40
      %p49 = scmp.eq.s32.totalorder %s32, 1
      %p50 = por %p48, %p49
      %p51 = scmp.ne.s32.totalorder %s40, %s41
      %p52 = scmp.eq.s32.totalorder %s32, 0
      %p53 = por %p51, %p52
      %p54 = scmp.ne.s32.totalorder %s40, %s41
      %p55 = scmp.eq.s32.totalorder %s33, 1
      %p56 = por %p54, %p55
      %p58 = scmp.ne.s32.totalorder %s41, %s57
      %p59 = scmp.eq.s32.totalorder %s33, 0
      %p60 = por %p58, %p59
      %s61 = ssub.s32 %s27, %s34
      %p62 = scmp.eq.s32.totalorder %s61, 0
      %s64 = sadd.s32 %s63, 1
      %s65 = scalar_select %p62, %s63, %s64
      %p68 = pneg %p62
      %p69 = scmp.eq.s32.totalorder %s27, 1
      %p70 = por %p68, %p69
      %p71 = scmp.ne.s32.totalorder %s63, %s66
      %p72 = scmp.eq.s32.totalorder %s27, 0
      %p73 = por %p71, %p72
      %p74 = scmp.ne.s32.totalorder %s63, %s66
      %p75 = scmp.eq.s32.totalorder %s32, 1
      %p76 = por %p74, %p75
      %p77 = scmp.ne.s32.totalorder %s66, %s67
      %p78 = scmp.eq.s32.totalorder %s32, 0
      %p79 = por %p77, %p78
      %p80 = scmp.ne.s32.totalorder %s66, %s67
      %p81 = scmp.eq.s32.totalorder %s33, 1
      %p82 = por %p80, %p81
      %p84 = scmp.ne.s32.totalorder %s67, %s83
      %p85 = scmp.eq.s32.totalorder %s33, 0
      %p86 = por %p84, %p85
      %s87 = ssub.s32 %s27, %s34
      %p88 = scmp.eq.s32.totalorder %s87, 0
      %s90 = sadd.s32 %s89, 1
      %s91 = scalar_select %p88, %s89, %s90
      %p94 = pneg %p88
      %p95 = scmp.eq.s32.totalorder %s27, 1
      %p96 = por %p94, %p95
      %p97 = scmp.ne.s32.totalorder %s89, %s92
      %p98 = scmp.eq.s32.totalorder %s27, 0
      %p99 = por %p97, %p98
      %p100 = scmp.ne.s32.totalorder %s89, %s92
      %p101 = scmp.eq.s32.totalorder %s32, 1
      %p102 = por %p100, %p101
      %p103 = scmp.ne.s32.totalorder %s92, %s93
      %p104 = scmp.eq.s32.totalorder %s32, 0
      %p105 = por %p103, %p104
      %p106 = scmp.ne.s32.totalorder %s92, %s93
      %p107 = scmp.eq.s32.totalorder %s33, 1
      %p108 = por %p106, %p107
      %p110 = scmp.ne.s32.totalorder %s93, %s109
      %p111 = scmp.eq.s32.totalorder %s33, 0
      %p112 = por %p110, %p111
      %s114 = sadd.s32 %s113, 1
      %p117 = scmp.eq.s32.totalorder %s27, 1
      %p118 = scmp.ne.s32.totalorder %s113, %s115
      %p119 = scmp.eq.s32.totalorder %s27, 0
      %p120 = por %p118, %p119
      %p121 = scmp.ne.s32.totalorder %s113, %s115
      %p122 = scmp.eq.s32.totalorder %s32, 1
      %p123 = por %p121, %p122
      %p124 = scmp.ne.s32.totalorder %s115, %s116
      %p125 = scmp.eq.s32.totalorder %s32, 0
      %p126 = por %p124, %p125
      %p127 = scmp.ne.s32.totalorder %s115, %s116
      %p128 = scmp.eq.s32.totalorder %s33, 1
      %p129 = por %p127, %p128
      %p131 = scmp.ne.s32.totalorder %s116, %s130
      %p132 = scmp.eq.s32.totalorder %s33, 0
      %p133 = por %p131, %p132
      %s135 = sadd.s32 %s134, 1
      %p138 = scmp.eq.s32.totalorder %s27, 1
      %p139 = scmp.ne.s32.totalorder %s134, %s136
      %p140 = scmp.eq.s32.totalorder %s27, 0
      %p141 = por %p139, %p140
      %p142 = scmp.ne.s32.totalorder %s134, %s136
      %p143 = scmp.eq.s32.totalorder %s32, 1
      %p144 = por %p142, %p143
      %p145 = scmp.ne.s32.totalorder %s136, %s137
      %p146 = scmp.eq.s32.totalorder %s32, 0
      %p147 = por %p145, %p146
      %p148 = scmp.ne.s32.totalorder %s136, %s137
      %p149 = scmp.eq.s32.totalorder %s33, 1
      %p150 = por %p148, %p149
      %p152 = scmp.ne.s32.totalorder %s137, %s151
      %p153 = scmp.eq.s32.totalorder %s33, 0
      %p154 = por %p152, %p153
      %s156 = sadd.s32 %s155, 1
      %p159 = scmp.eq.s32.totalorder %s27, 1
      %p160 = scmp.ne.s32.totalorder %s155, %s157
      %p161 = scmp.eq.s32.totalorder %s27, 0
      %p162 = por %p160, %p161
      %p163 = scmp.ne.s32.totalorder %s155, %s157
      %p164 = scmp.eq.s32.totalorder %s32, 1
      %p165 = por %p163, %p164
      %p166 = scmp.ne.s32.totalorder %s157, %s158
      %p167 = scmp.eq.s32.totalorder %s32, 0
      %p168 = por %p166, %p167
      %p169 = scmp.ne.s32.totalorder %s157, %s158
      %p170 = scmp.eq.s32.totalorder %s33, 1
      %p171 = por %p169, %p170
      %p173 = scmp.ne.s32.totalorder %s158, %s172
      %p174 = scmp.eq.s32.totalorder %s33, 0
      %p175 = por %p173, %p174
      %s177 = sadd.s32 %s176, 1
      %p180 = scmp.eq.s32.totalorder %s27, 1
      %p181 = scmp.ne.s32.totalorder %s176, %s178
      %p182 = scmp.eq.s32.totalorder %s27, 0
      %p183 = por %p181, %p182
      %p184 = scmp.ne.s32.totalorder %s176, %s178
      %p185 = scmp.eq.s32.totalorder %s32, 1
      %p186 = por %p184, %p185
      %p187 = scmp.ne.s32.totalorder %s178, %s179
      %p188 = scmp.eq.s32.totalorder %s32, 0
      %p189 = por %p187, %p188
      %p190 = scmp.ne.s32.totalorder %s178, %s179
      %p191 = scmp.eq.s32.totalorder %s33, 1
      %p192 = por %p190, %p191
      %p194 = scmp.ne.s32.totalorder %s179, %s193
      %p195 = scmp.eq.s32.totalorder %s33, 0
      %p196 = por %p194, %p195
      %s198 = sadd.s32 %s197, 1
      %p201 = scmp.eq.s32.totalorder %s27, 1
      %p202 = scmp.ne.s32.totalorder %s197, %s199
      %p203 = scmp.eq.s32.totalorder %s27, 0
      %p204 = por %p202, %p203
      %p205 = scmp.ne.s32.totalorder %s197, %s199
      %p206 = scmp.eq.s32.totalorder %s32, 1
      %p207 = por %p205, %p206
      %p208 = scmp.ne.s32.totalorder %s199, %s200
      %p209 = scmp.eq.s32.totalorder %s32, 0
      %p210 = por %p208, %p209
      %p211 = scmp.ne.s32.totalorder %s199, %s200
      %p212 = scmp.eq.s32.totalorder %s33, 1
      %p213 = por %p211, %p212
      %p215 = scmp.ne.s32.totalorder %s200, %s214
      %p216 = scmp.eq.s32.totalorder %s33, 0
      %p217 = por %p215, %p216
      %s219 = sadd.s32 %s218, 1
      %p222 = scmp.eq.s32.totalorder %s27, 1
      %p223 = scmp.ne.s32.totalorder %s218, %s220
      %p224 = scmp.eq.s32.totalorder %s27, 0
      %p225 = por %p223, %p224
      %p226 = scmp.ne.s32.totalorder %s218, %s220
      %p227 = scmp.eq.s32.totalorder %s32, 1
      %p228 = por %p226, %p227
      %p229 = scmp.ne.s32.totalorder %s220, %s221
      %p230 = scmp.eq.s32.totalorder %s32, 0
      %p231 = por %p229, %p230
      %p232 = scmp.ne.s32.totalorder %s220, %s221
      %p233 = scmp.eq.s32.totalorder %s33, 1
      %p234 = por %p232, %p233
      %p236 = scmp.ne.s32.totalorder %s221, %s235
      %p237 = scmp.eq.s32.totalorder %s33, 0
      %p238 = por %p236, %p237
      %s240 = sadd.s32 %s239, 1
      %p243 = scmp.eq.s32.totalorder %s27, 1
      %p244 = scmp.ne.s32.totalorder %s239, %s241
      %p245 = scmp.eq.s32.totalorder %s27, 0
      %p246 = por %p244, %p245
      %p247 = scmp.ne.s32.totalorder %s239, %s241
      %p248 = scmp.eq.s32.totalorder %s32, 1
      %p249 = por %p247, %p248
      %p250 = scmp.ne.s32.totalorder %s241, %s242
      %p251 = scmp.eq.s32.totalorder %s32, 0
      %p252 = por %p250, %p251
      %p253 = scmp.ne.s32.totalorder %s241, %s242
      %p254 = scmp.eq.s32.totalorder %s33, 1
      %p255 = por %p253, %p254
      %p257 = scmp.ne.s32.totalorder %s242, %s256
      %p258 = scmp.eq.s32.totalorder %s33, 0
      %p259 = por %p257, %p258
      %s260 = ssub.s32 %s27, %s34
      %p261 = scmp.eq.s32.totalorder %s260, 0
      %s263 = sadd.s32 %s262, 1
      %s264 = scalar_select %p261, %s262, %s263
      %p267 = pneg %p261
      %p268 = scmp.eq.s32.totalorder %s27, 1
      %p269 = por %p267, %p268
      %p270 = scmp.ne.s32.totalorder %s262, %s265
      %p271 = scmp.eq.s32.totalorder %s27, 0
      %p272 = por %p270, %p271
      %p273 = scmp.ne.s32.totalorder %s262, %s265
      %p274 = scmp.eq.s32.totalorder %s32, 1
      %p275 = por %p273, %p274
      %p276 = scmp.ne.s32.totalorder %s265, %s266
      %p277 = scmp.eq.s32.totalorder %s32, 0
      %p278 = por %p276, %p277
      %p279 = scmp.ne.s32.totalorder %s265, %s266
      %p280 = scmp.eq.s32.totalorder %s33, 1
      %p281 = por %p279, %p280
      %p283 = scmp.ne.s32.totalorder %s266, %s282
      %p284 = scmp.eq.s32.totalorder %s33, 0
      %p285 = por %p283, %p284
      %p286 = scmp.le.s32.totalorder 1, %s27
      %p287 = scmp.lt.s32.totalorder %s27, 3
      %p288 = pnand %p286, %p287
      %p289 = pneg %p288
      // Predicated region
      $region9: #{tpu_custom_call.1} parent=5 // pred_check
        _
      $region10: #{tpu_custom_call.1} parent=5 // pred_check_branch
        %291 = sbr.rel (%p288) target = $region12
      $region11: #{tpu_custom_call.1} parent=5 // pred_region
        %s292 = ssub.s32 %s27, 1
        // Predicated region
        $region13: #{tpu_custom_call.1} parent=11 // pred_check
          %p293 = pneg %p126
        $region14: #{tpu_custom_call.1} parent=11 // pred_check_branch
          %295 = sbr.rel (%p293) target = $region16
        $region15: #{tpu_custom_call.1} parent=11 // pred_region
          %297 = vsyncadd [#allocation9], 0
          %s298 = sshll.u32 %s3, 4
          %s299 = int_to_ptr.hbm [resolvable:$true] %s298
          %s300 = sshll.u32 [#allocation8], 4
          %s301 = int_to_ptr.vmem [resolvable:$true] %s300
          %306 = dma.hbm_to_vmem [thread:$0]  %s299, 512, %s301, [#allocation9], 128, 128, 8
        $region16: #{tpu_custom_call.1} parent=11 // pred_fallthru
          _
        // Predicated region
        $region17: #{tpu_custom_call.1} parent=11 // pred_check
          %p307 = pneg %p147
        $region18: #{tpu_custom_call.1} parent=11 // pred_check_branch
          %309 = sbr.rel (%p307) target = $region20
        $region19: #{tpu_custom_call.1} parent=11 // pred_region
          _
        $region20: #{tpu_custom_call.1} parent=11 // pred_fallthru
          _
        // Predicated region
        $region21: #{tpu_custom_call.1} parent=11 // pred_check
          %p310 = pneg %p168
        $region22: #{tpu_custom_call.1} parent=11 // pred_check_branch
          %312 = sbr.rel (%p310) target = $region24
        $region23: #{tpu_custom_call.1} parent=11 // pred_region
          %314 = vsyncadd [#allocation9], 0
          %s315 = sshll.u32 %s5, 4
          %s316 = int_to_ptr.hbm [resolvable:$true] %s315
          %s317 = sshll.u32 [#allocation10], 4
          %s318 = int_to_ptr.vmem [resolvable:$true] %s317
          %323 = dma.hbm_to_vmem [thread:$0]  %s316, 512, %s318, [#allocation9], 128, 128, 8
        $region24: #{tpu_custom_call.1} parent=11 // pred_fallthru
          _
        // Predicated region
        $region25: #{tpu_custom_call.1} parent=11 // pred_check
          %p324 = pneg %p189
        $region26: #{tpu_custom_call.1} parent=11 // pred_check_branch
          %326 = sbr.rel (%p324) target = $region28
        $region27: #{tpu_custom_call.1} parent=11 // pred_region
          _
        $region28: #{tpu_custom_call.1} parent=11 // pred_fallthru
          _
        // Predicated region
        $region29: #{tpu_custom_call.1} parent=11 // pred_check
          %p327 = pneg %p210
        $region30: #{tpu_custom_call.1} parent=11 // pred_check_branch
          %329 = sbr.rel (%p327) target = $region32
        $region31: #{tpu_custom_call.1} parent=11 // pred_region
          %331 = vsyncadd [#allocation12], 0
          %s332 = sshll.u32 %s7, 4
          %s333 = int_to_ptr.hbm [resolvable:$true] %s332
          %s334 = sshll.u32 [#allocation11], 4
          %s335 = int_to_ptr.vmem [resolvable:$true] %s334
          %340 = dma.hbm_to_vmem [thread:$0]  %s333, 512, %s335, [#allocation12], 128, 128, 8
        $region32: #{tpu_custom_call.1} parent=11 // pred_fallthru
          _
        // Predicated region
        $region33: #{tpu_custom_call.1} parent=11 // pred_check
          %p341 = pneg %p231
        $region34: #{tpu_custom_call.1} parent=11 // pred_check_branch
          %343 = sbr.rel (%p341) target = $region36
        $region35: #{tpu_custom_call.1} parent=11 // pred_region
          _
        $region36: #{tpu_custom_call.1} parent=11 // pred_fallthru
          _
        // Predicated region
        $region37: #{tpu_custom_call.1} parent=11 // pred_check
          %p344 = pneg %p252
        $region38: #{tpu_custom_call.1} parent=11 // pred_check_branch
          %346 = sbr.rel (%p344) target = $region40
        $region39: #{tpu_custom_call.1} parent=11 // pred_region
          _
        $region40: #{tpu_custom_call.1} parent=11 // pred_fallthru
          _
      $region12: #{tpu_custom_call.1} parent=5 // pred_fallthru
        _
      %p347 = scmp.lt.s32.totalorder %s27, 2
      // Predicated region
      $region41: #{tpu_custom_call.1} parent=5 // pred_check
        %p348 = pneg %p347
      $region42: #{tpu_custom_call.1} parent=5 // pred_check_branch
        %350 = sbr.rel (%p348) target = $region44
      $region43: #{tpu_custom_call.1} parent=5 // pred_region
        // Predicated region
        $region45: #{tpu_custom_call.1} parent=43 // pred_check
          %p351 = pneg %p47
        $region46: #{tpu_custom_call.1} parent=43 // pred_check_branch
          %353 = sbr.rel (%p351) target = $region48
        $region47: #{tpu_custom_call.1} parent=43 // pred_region
          %s354 = sand.u32 %s37, 1
          %s355 = scalar_lea.sflag [#allocation3], %s354
          %s356 = sand.u32 %s37, 1
          %s357 = smul.addr %s356, 64
          %s358 = scalar_lea.vmem [#allocation2], %s357
          %s359 = smul.u32 8, %s27
          %361 = vsyncadd %s355, 0
          %s362 = smul.addr %s359, 8
          %s363 = scalar_lea.hbm %s0, %s362
          %s364 = sshll.u32 %s363, 4
          %s365 = int_to_ptr.hbm [resolvable:$true] %s364
          %s366 = sshll.u32 %s358, 4
          %s367 = int_to_ptr.vmem [resolvable:$true] %s366
          %372 = dma.hbm_to_vmem [thread:$0]  %s365, 1024, %s367, %s355, 128, 128, 8
        $region48: #{tpu_custom_call.1} parent=43 // pred_fallthru
          _
        // Predicated region
        $region49: #{tpu_custom_call.1} parent=43 // pred_check
          %p373 = pneg %p73
        $region50: #{tpu_custom_call.1} parent=43 // pred_check_branch
          %375 = sbr.rel (%p373) target = $region52
        $region51: #{tpu_custom_call.1} parent=43 // pred_region
          %s376 = sand.u32 %s27, 1
          %s377 = scalar_lea.sflag [#allocation6], %s376
          %s378 = sand.u32 %s63, 1
          %s379 = smul.addr %s378, 8
          %s380 = scalar_lea.vmem [#allocation5], %s379
          %382 = vsyncadd %s377, 0
          %s383 = smul.addr %s27, 8
          %s384 = scalar_lea.hbm %s1, %s383
          %s386 = sshll.u32 %s384, 4
          %s387 = int_to_ptr.hbm [resolvable:$true] %s386
          %s388 = sshll.u32 %s380, 4
          %s389 = int_to_ptr.vmem [resolvable:$true] %s388
          %391 = dma.hbm_to_vmem [thread:$0]  %s387, 128, %s389, %s377
        $region52: #{tpu_custom_call.1} parent=43 // pred_fallthru
          _
        // Predicated region
        $region53: #{tpu_custom_call.1} parent=43 // pred_check
          %p392 = pneg %p99
        $region54: #{tpu_custom_call.1} parent=43 // pred_check_branch
          %394 = sbr.rel (%p392) target = $region56
        $region55: #{tpu_custom_call.1} parent=43 // pred_region
          %s395 = sand.u32 %s27, 1
          %s396 = scalar_lea.sflag [#allocation6], %s395
          %s397 = sand.u32 %s89, 1
          %s398 = smul.addr %s397, 8
          %s399 = scalar_lea.vmem [#allocation7], %s398
          %401 = vsyncadd %s396, 0
          %s402 = smul.addr %s27, 8
          %s403 = scalar_lea.hbm %s2, %s402
          %s405 = sshll.u32 %s403, 4
          %s406 = int_to_ptr.hbm [resolvable:$true] %s405
          %s407 = sshll.u32 %s399, 4
          %s408 = int_to_ptr.vmem [resolvable:$true] %s407
          %410 = dma.hbm_to_vmem [thread:$0]  %s406, 128, %s408, %s396
        $region56: #{tpu_custom_call.1} parent=43 // pred_fallthru
          _
      $region44: #{tpu_custom_call.1} parent=5 // pred_fallthru
        _
      %p411 = scmp.le.s32.totalorder 1, %s27
      %p412 = scmp.lt.s32.totalorder %s27, 3
      %p413 = pnand %p411, %p412
      %p414 = pneg %p413
      // Predicated region
      $region57: #{tpu_custom_call.1} parent=5 // pred_check
        _
      $region58: #{tpu_custom_call.1} parent=5 // pred_check_branch
        %416 = sbr.rel (%p413) target = $region60
      $region59: #{tpu_custom_call.1} parent=5 // pred_region
        %s417 = ssub.s32 %s27, 1
        %s418 = sand.u32 %s40, 1
        %s419 = scalar_lea.sflag [#allocation3], %s418
        %s420 = sand.u32 %s40, 1
        %s421 = smul.addr %s420, 64
        %s422 = scalar_lea.vmem [#allocation2], %s421
        // Predicated region
        $region61: #{tpu_custom_call.1} parent=59 // pred_check
          %p423 = pneg %p53
        $region62: #{tpu_custom_call.1} parent=59 // pred_check_branch
          %425 = sbr.rel (%p423) target = $region64
        $region63: #{tpu_custom_call.1} parent=59 // pred_region
          %427 = dma.done %s419, 1024
        $region64: #{tpu_custom_call.1} parent=59 // pred_fallthru
          _
        %s428 = sand.u32 %s32, 1
        %s429 = scalar_lea.sflag [#allocation6], %s428
        %s430 = sand.u32 %s66, 1
        %s431 = smul.addr %s430, 8
        %s432 = scalar_lea.vmem [#allocation5], %s431
        // Predicated region
        $region65: #{tpu_custom_call.1} parent=59 // pred_check
          %p433 = pneg %p79
        $region66: #{tpu_custom_call.1} parent=59 // pred_check_branch
          %435 = sbr.rel (%p433) target = $region68
        $region67: #{tpu_custom_call.1} parent=59 // pred_region
          %437 = dma.done %s429, 128
        $region68: #{tpu_custom_call.1} parent=59 // pred_fallthru
          _
        %s438 = sand.u32 %s32, 1
        %s439 = scalar_lea.sflag [#allocation6], %s438
        %s440 = sand.u32 %s92, 1
        %s441 = smul.addr %s440, 8
        %s442 = scalar_lea.vmem [#allocation7], %s441
        // Predicated region
        $region69: #{tpu_custom_call.1} parent=59 // pred_check
          %p443 = pneg %p105
        $region70: #{tpu_custom_call.1} parent=59 // pred_check_branch
          %445 = sbr.rel (%p443) target = $region72
        $region71: #{tpu_custom_call.1} parent=59 // pred_region
          %447 = dma.done %s439, 128
        $region72: #{tpu_custom_call.1} parent=59 // pred_fallthru
          _
        // Predicated region
        $region73: #{tpu_custom_call.1} parent=59 // pred_check
          %p448 = pneg %p126
        $region74: #{tpu_custom_call.1} parent=59 // pred_check_branch
          %450 = sbr.rel (%p448) target = $region76
        $region75: #{tpu_custom_call.1} parent=59 // pred_region
          %452 = dma.done [#allocation9], 512
        $region76: #{tpu_custom_call.1} parent=59 // pred_fallthru
          _
        // Predicated region
        $region77: #{tpu_custom_call.1} parent=59 // pred_check
          %p453 = pneg %p168
        $region78: #{tpu_custom_call.1} parent=59 // pred_check_branch
          %455 = sbr.rel (%p453) target = $region80
        $region79: #{tpu_custom_call.1} parent=59 // pred_region
          %457 = dma.done [#allocation9], 512
        $region80: #{tpu_custom_call.1} parent=59 // pred_fallthru
          _
        // Predicated region
        $region81: #{tpu_custom_call.1} parent=59 // pred_check
          %p458 = pneg %p210
        $region82: #{tpu_custom_call.1} parent=59 // pred_check_branch
          %460 = sbr.rel (%p458) target = $region84
        $region83: #{tpu_custom_call.1} parent=59 // pred_region
          %462 = dma.done [#allocation12], 512
        $region84: #{tpu_custom_call.1} parent=59 // pred_fallthru
          _
        %s463 = sand.u32 %s40, 1
        %s464 = scalar_lea.sflag [#allocation3], %s463
        %s465 = sand.u32 %s40, 1
        %s466 = smul.addr %s465, 64
        %s467 = scalar_lea.vmem [#allocation2], %s466
        %p468 = pneg %p53
        %p469 = pneg %p50
        %s470 = sand.u32 %s32, 1
        %s471 = scalar_lea.sflag [#allocation6], %s470
        %s472 = sand.u32 %s66, 1
        %s473 = smul.addr %s472, 8
        %s474 = scalar_lea.vmem [#allocation5], %s473
        %p475 = pneg %p79
        %p476 = pneg %p76
        %s477 = sand.u32 %s32, 1
        %s478 = scalar_lea.sflag [#allocation6], %s477
        %s479 = sand.u32 %s92, 1
        %s480 = smul.addr %s479, 8
        %s481 = scalar_lea.vmem [#allocation7], %s480
        %p482 = pneg %p105
        %p483 = pneg %p102
        %p484 = pneg %p126
        %p485 = pneg %p123
        %p486 = pneg %p147
        %p487 = pneg %p144
        %p488 = pneg %p168
        %p489 = pneg %p165
        %p490 = pneg %p189
        %p491 = pneg %p186
        %p492 = pneg %p210
        %p493 = pneg %p207
        %p494 = pneg %p231
        %p495 = pneg %p228
        %p496 = pneg %p252
        %p497 = pneg %p249
        %p498 = pneg %p278
        %p499 = pneg %p275
        %s500 = sand.u32 %s265, 1
        %s501 = scalar_lea.sflag [#allocation4], %s500
        %s502 = sand.u32 %s265, 1
        %s503 = smul.addr %s502, 8
        %s504 = scalar_lea.vmem [#allocation13], %s503
        %s505 = smul.u32 8, %s32
        %v506 = vld [vmem:[%s422] sm:$0xff]
        %v507 = vld [vmem:[%s422 + $0x8] sm:$0xff]
        %v508 = vld [vmem:[%s422 + $0x10] sm:$0xff]
        %v509 = vld [vmem:[%s422 + $0x18] sm:$0xff]
        %v510 = vld [vmem:[%s422 + $0x20] sm:$0xff]
        %v511 = vld [vmem:[%s422 + $0x28] sm:$0xff]
        %v512 = vld [vmem:[%s422 + $0x30] sm:$0xff]
        %v513 = vld [vmem:[%s422 + $0x38] sm:$0xff]
        %v514 = vld [vmem:[%s432] sm:$0xff]
        %v515 = vld [vmem:[#allocation8] sm:$0xff]
        %v516 = vld [vmem:[#allocation8 + $0x8] sm:$0xff]
        %v517 = vld [vmem:[#allocation8 + $0x10] sm:$0xff]
        %v518 = vld [vmem:[#allocation8 + $0x18] sm:$0xff]
        %v519 = vld [vmem:[%s4] sm:$0x1]
        %v521 = vperm.slane %v519, 0
        %vm523 = vcmask 261120
        %v525 = vsel %vm523, %v514, 0
        %527 = vmatpush.msra.mxu0 0.0
        %528 = vmatpush.msra.mxu0 0.0
        %529 = vmatpush.msra.mxu0 0.0
        %530 = vmatpush.msra.mxu0 0.0
        %531 = vmatpush.msra.mxu0 0.0
        %532 = vmatpush.msra.mxu0 0.0
        %533 = vmatpush.msra.mxu0 0.0
        %534 = vmatpush.msra.mxu0 0.0
        %535 = vmatpush.msra.mxu0 0.0
        %536 = vmatpush.msra.mxu0 0.0
        %537 = vmatpush.msra.mxu0 0.0
        %538 = vmatpush.msra.mxu0 0.0
        %539 = vmatpush.msra.mxu0 %v518
        %540 = vmatpush.msra.mxu0 %v517
        %541 = vmatpush.msra.mxu0 %v516
        %542 = vmatpush.msra.mxu0 %v515
        %543 = vmatmul.f32.gmra.mxu0 %v525
        %v544 = vpop.f32.mrf.mxu0
        %v545 = vadd.f32 %v521, %v544
        %546 = vdwg.mxu0
        %v547 = vmax.f32 %v545, 0.0
        %v548 = vld [vmem:[%s442] sm:$0xff]
        %v549 = vld [vmem:[#allocation11] sm:$0xff]
        %v550 = vld [vmem:[#allocation11 + $0x8] sm:$0xff]
        %v551 = vld [vmem:[#allocation11 + $0x10] sm:$0xff]
        %v552 = vld [vmem:[#allocation11 + $0x18] sm:$0xff]
        %v553 = vld [vmem:[%s8] sm:$0x1]
        %v555 = vperm.slane %v553, 0
        %v558 = vsel %vm523, %v548, 0
        %560 = vmatpush.msra.mxu0 0.0
        %561 = vmatpush.msra.mxu0 0.0
        %562 = vmatpush.msra.mxu0 0.0
        %563 = vmatpush.msra.mxu0 0.0
        %564 = vmatpush.msra.mxu0 0.0
        %565 = vmatpush.msra.mxu0 0.0
        %566 = vmatpush.msra.mxu0 0.0
        %567 = vmatpush.msra.mxu0 0.0
        %568 = vmatpush.msra.mxu0 0.0
        %569 = vmatpush.msra.mxu0 0.0
        %570 = vmatpush.msra.mxu0 0.0
        %571 = vmatpush.msra.mxu0 0.0
        %572 = vmatpush.msra.mxu0 %v552
        %573 = vmatpush.msra.mxu0 %v551
        %574 = vmatpush.msra.mxu0 %v550
        %575 = vmatpush.msra.mxu0 %v549
        %576 = vmatmul.f32.gmra.mxu0 %v558
        %v577 = vpop.f32.mrf.mxu0
        %v578 = vadd.f32 %v555, %v577
        %579 = vdwg.mxu0
        %v580 = vmax.f32 %v578, 0.0
        %v581 = vld [vmem:[#allocation10] sm:$0xff]
        %v582 = vld [vmem:[#allocation10 + $0x8] sm:$0xff]
        %v583 = vld [vmem:[#allocation10 + $0x10] sm:$0xff]
        %v584 = vld [vmem:[#allocation10 + $0x18] sm:$0xff]
        %v585 = vld [vmem:[%s6] sm:$0x1]
        %v587 = vperm.slane %v585, 0
        %v590 = vsel %vm523, %v506, 0
        %v593 = vsel %vm523, %v507, 0
        %v596 = vsel %vm523, %v508, 0
        %v599 = vsel %vm523, %v509, 0
        %v602 = vsel %vm523, %v510, 0
        %v605 = vsel %vm523, %v511, 0
        %v608 = vsel %vm523, %v512, 0
        %v611 = vsel %vm523, %v513, 0
        %613 = vmatpush.msra.mxu0 0.0
        %614 = vmatpush.msra.mxu0 0.0
        %615 = vmatpush.msra.mxu0 0.0
        %616 = vmatpush.msra.mxu0 0.0
        %617 = vmatpush.msra.mxu0 0.0
        %618 = vmatpush.msra.mxu0 0.0
        %619 = vmatpush.msra.mxu0 0.0
        %620 = vmatpush.msra.mxu0 0.0
        %621 = vmatpush.msra.mxu0 0.0
        %622 = vmatpush.msra.mxu0 0.0
        %623 = vmatpush.msra.mxu0 0.0
        %624 = vmatpush.msra.mxu0 0.0
        %625 = vmatpush.msra.mxu0 %v584
        %626 = vmatpush.msra.mxu0 %v583
        %627 = vmatpush.msra.mxu0 %v582
        %628 = vmatpush.msra.mxu0 %v581
        %629 = vmatmul.f32.gmra.mxu0 %v590
        %v630 = vpop.f32.mrf.mxu0
        %v631 = vadd.f32 %v587, %v630
        %632 = vmatmul.f32.gmra.mxu0 %v593
        %v633 = vpop.f32.mrf.mxu0
        %v634 = vadd.f32 %v587, %v633
        %635 = vmatmul.f32.gmra.mxu0 %v596
        %v636 = vpop.f32.mrf.mxu0
        %v637 = vadd.f32 %v587, %v636
        %638 = vmatmul.f32.gmra.mxu0 %v599
        %v639 = vpop.f32.mrf.mxu0
        %v640 = vadd.f32 %v587, %v639
        %641 = vmatmul.f32.gmra.mxu0 %v602
        %v642 = vpop.f32.mrf.mxu0
        %v643 = vadd.f32 %v587, %v642
        %644 = vmatmul.f32.gmra.mxu0 %v605
        %v645 = vpop.f32.mrf.mxu0
        %v646 = vadd.f32 %v587, %v645
        %647 = vmatmul.f32.gmra.mxu0 %v608
        %v648 = vpop.f32.mrf.mxu0
        %v649 = vadd.f32 %v587, %v648
        %650 = vmatmul.f32.gmra.mxu0 %v611
        %v651 = vpop.f32.mrf.mxu0
        %v652 = vadd.f32 %v587, %v651
        %653 = vdwg.mxu0
        %v654 = vmax.f32 %v631, 0.0
        %v655 = vmax.f32 %v634, 0.0
        %v656 = vmax.f32 %v637, 0.0
        %v657 = vmax.f32 %v640, 0.0
        %v658 = vmax.f32 %v643, 0.0
        %v659 = vmax.f32 %v646, 0.0
        %v660 = vmax.f32 %v649, 0.0
        %v661 = vmax.f32 %v652, 0.0
        %v662 = vadd.f32 %v547, %v580
        %v664 = vrot.slane %v662, 1
        %v665 = vrot.slane %v662, 2
        %v666 = vrot.slane %v662, 3
        %v667 = vrot.slane %v662, 4
        %v668 = vrot.slane %v662, 5
        %v669 = vrot.slane %v662, 6
        %v670 = vrot.slane %v662, 7
        %v671 = vperm.slane %v662, 0
        %v672 = vperm.slane %v664, 0
        %v673 = vperm.slane %v665, 0
        %v674 = vperm.slane %v666, 0
        %v675 = vperm.slane %v667, 0
        %v676 = vperm.slane %v668, 0
        %v677 = vperm.slane %v669, 0
        %v678 = vperm.slane %v670, 0
        %v687 = vadd.f32 %v654, %v671
        %v688 = vadd.f32 %v655, %v672
        %v689 = vadd.f32 %v656, %v673
        %v690 = vadd.f32 %v657, %v674
        %v691 = vadd.f32 %v658, %v675
        %v692 = vadd.f32 %v659, %v676
        %v693 = vadd.f32 %v660, %v677
        %v694 = vadd.f32 %v661, %v678
        %v695 = vld [vmem:[%s9] sm:$0x1]
        %v697 = vperm.slane %v695, 0
        %v699 = vmul.f32 %v687, %v697
        %v700 = vmul.f32 %v688, %v697
        %v701 = vmul.f32 %v689, %v697
        %v702 = vmul.f32 %v690, %v697
        %v703 = vmul.f32 %v691, %v697
        %v704 = vmul.f32 %v692, %v697
        %v705 = vmul.f32 %v693, %v697
        %v706 = vmul.f32 %v694, %v697
        %v707 = vsel %vm523, %v699, 0.0
        %708 = vadd.xlane.f32.xlu0 %v707
        %v709 = vpop.xlane.xlu0 %708
        %v710 = vsel %vm523, %v700, 0.0
        %711 = vadd.xlane.f32.xlu0 %v710
        %v712 = vpop.xlane.xlu0 %711
        %v713 = vsel %vm523, %v701, 0.0
        %714 = vadd.xlane.f32.xlu0 %v713
        %v715 = vpop.xlane.xlu0 %714
        %v716 = vsel %vm523, %v702, 0.0
        %717 = vadd.xlane.f32.xlu0 %v716
        %v718 = vpop.xlane.xlu0 %717
        %v719 = vsel %vm523, %v703, 0.0
        %720 = vadd.xlane.f32.xlu0 %v719
        %v721 = vpop.xlane.xlu0 %720
        %v722 = vsel %vm523, %v704, 0.0
        %723 = vadd.xlane.f32.xlu0 %v722
        %v724 = vpop.xlane.xlu0 %723
        %v725 = vsel %vm523, %v705, 0.0
        %726 = vadd.xlane.f32.xlu0 %v725
        %v727 = vpop.xlane.xlu0 %726
        %v728 = vsel %vm523, %v706, 0.0
        %729 = vadd.xlane.f32.xlu0 %v728
        %v730 = vpop.xlane.xlu0 %729
        %v739 = vlaneseq
        %v740 = vand.u32 %v739, 127
        %v741 = vperm.slane %v709, %v740
        %v742 = vperm.slane %v712, %v740
        %v743 = vperm.slane %v715, %v740
        %v744 = vperm.slane %v718, %v740
        %v745 = vperm.slane %v721, %v740
        %v746 = vperm.slane %v724, %v740
        %v747 = vperm.slane %v727, %v740
        %v748 = vperm.slane %v730, %v740
        %vm749 = vcmask 1041409
        %v750 = vsel %vm749, %v742, %v741
        %vm751 = vcmask 1042434
        %v752 = vsel %vm751, %v743, %v750
        %vm753 = vcmask 1043459
        %v754 = vsel %vm753, %v744, %v752
        %vm755 = vcmask 1044484
        %v756 = vsel %vm755, %v745, %v754
        %vm757 = vcmask 1045509
        %v758 = vsel %vm757, %v746, %v756
        %vm759 = vcmask 1046534
        %v760 = vsel %vm759, %v747, %v758
        %vm761 = vcmask 1047559
        %v762 = vsel %vm761, %v748, %v760
        %vm764 = vcmask 64512
        %v765 = vsel %vm764, %v762, -inf
        %766 = vmax.xlane.f32.xlu0 %v765
        %v767 = vpop.xlane.xlu0 %766
        %v769 = vperm.slane %v767, 0
        %v770 = vperm.slane %v767, 1
        %v771 = vperm.slane %v767, 2
        %v772 = vperm.slane %v767, 3
        %v773 = vperm.slane %v767, 4
        %v774 = vperm.slane %v767, 5
        %v775 = vperm.slane %v767, 6
        %v776 = vperm.slane %v767, 7
        %v785 = vsub.f32 %v709, %v769
        %v786 = vsub.f32 %v712, %v770
        %v787 = vsub.f32 %v715, %v771
        %v788 = vsub.f32 %v718, %v772
        %v789 = vsub.f32 %v721, %v773
        %v790 = vsub.f32 %v724, %v774
        %v791 = vsub.f32 %v727, %v775
        %v792 = vsub.f32 %v730, %v776
        %v793 = vmul.f32 %v785, 1.442695
        %v794 = vpow.pop %v793
        %v795 = vmul.f32 %v786, 1.442695
        %v796 = vpow.pop %v795
        %v797 = vmul.f32 %v787, 1.442695
        %v798 = vpow.pop %v797
        %v799 = vmul.f32 %v788, 1.442695
        %v800 = vpow.pop %v799
        %v801 = vmul.f32 %v789, 1.442695
        %v802 = vpow.pop %v801
        %v803 = vmul.f32 %v790, 1.442695
        %v804 = vpow.pop %v803
        %v805 = vmul.f32 %v791, 1.442695
        %v806 = vpow.pop %v805
        %v807 = vmul.f32 %v792, 1.442695
        %v808 = vpow.pop %v807
        %817 = vset.pattern.permute.xlu0 0
        %818 = vperm.xlu0 %817, %v794
        %v819 = vpop.permute.xlu0 %818
        %820 = vset.pattern.permute.xlu0 0
        %821 = vperm.xlu0 %820, %v796
        %v822 = vpop.permute.xlu0 %821
        %823 = vset.pattern.permute.xlu0 0
        %824 = vperm.xlu0 %823, %v798
        %v825 = vpop.permute.xlu0 %824
        %826 = vset.pattern.permute.xlu0 0
        %827 = vperm.xlu0 %826, %v800
        %v828 = vpop.permute.xlu0 %827
        %829 = vset.pattern.permute.xlu0 0
        %830 = vperm.xlu0 %829, %v802
        %v831 = vpop.permute.xlu0 %830
        %832 = vset.pattern.permute.xlu0 0
        %833 = vperm.xlu0 %832, %v804
        %v834 = vpop.permute.xlu0 %833
        %835 = vset.pattern.permute.xlu0 0
        %836 = vperm.xlu0 %835, %v806
        %v837 = vpop.permute.xlu0 %836
        %838 = vset.pattern.permute.xlu0 0
        %839 = vperm.xlu0 %838, %v808
        %v840 = vpop.permute.xlu0 %839
        %v841 = vperm.slane %v819, %v740
        %v842 = vperm.slane %v822, %v740
        %v843 = vperm.slane %v825, %v740
        %v844 = vperm.slane %v828, %v740
        %v845 = vperm.slane %v831, %v740
        %v846 = vperm.slane %v834, %v740
        %v847 = vperm.slane %v837, %v740
        %v848 = vperm.slane %v840, %v740
        %v849 = vsel %vm749, %v842, %v841
        %v850 = vsel %vm751, %v843, %v849
        %v851 = vsel %vm753, %v844, %v850
        %v852 = vsel %vm755, %v845, %v851
        %v853 = vsel %vm757, %v846, %v852
        %v854 = vsel %vm759, %v847, %v853
        %v855 = vsel %vm761, %v848, %v854
        %v857 = vsel %vm764, %v855, 0.0
        %858 = vadd.xlane.f32.xlu0 %v857
        %v859 = vpop.xlane.xlu0 %858
        %v860 = vrcp.pop %v859
        %v862 = vperm.slane %v860, 0
        %v863 = vperm.slane %v860, 1
        %v864 = vperm.slane %v860, 2
        %v865 = vperm.slane %v860, 3
        %v866 = vperm.slane %v860, 4
        %v867 = vperm.slane %v860, 5
        %v868 = vperm.slane %v860, 6
        %v869 = vperm.slane %v860, 7
        %v878 = vmul.f32 %v794, %v862
        %v879 = vmul.f32 %v796, %v863
        %v880 = vmul.f32 %v798, %v864
        %v881 = vmul.f32 %v800, %v865
        %v882 = vmul.f32 %v802, %v866
        %v883 = vmul.f32 %v804, %v867
        %v884 = vmul.f32 %v806, %v868
        %v885 = vmul.f32 %v808, %v869
        %887 = vset.pattern.permute.xlu0 0
        %888 = vperm.xlu0 %887, %v878
        %v889 = vpop.permute.xlu0 %888
        %v890 = vperm.slane %v889, %v740
        %v891 = vsel %vm764, %v890, 0
        %893 = vmatpush.msra.mxu0 0.0
        %894 = vmatpush.msra.mxu0 0.0
        %895 = vmatpush.msra.mxu0 0.0
        %896 = vmatpush.msra.mxu0 0.0
        %897 = vmatpush.msra.mxu0 0.0
        %898 = vmatpush.msra.mxu0 0.0
        %899 = vmatpush.msra.mxu0 0.0
        %900 = vmatpush.msra.mxu0 0.0
        %901 = vmatpush.msra.mxu0 0.0
        %902 = vmatpush.msra.mxu0 0.0
        %903 = vmatpush.msra.mxu0 0.0
        %904 = vmatpush.msra.mxu0 0.0
        %905 = vmatpush.msra.mxu0 0.0
        %906 = vmatpush.msra.mxu0 0.0
        %907 = vmatpush.msra.mxu0 0.0
        %908 = vmatpush.msra.mxu0 %v506
        %909 = vmatmul.f32.gmra.mxu0 %v891
        %v910 = vpop.f32.mrf.mxu0
        %v911 = vadd.f32 0.0, %v910
        %912 = vdwg.mxu0
        %914 = vset.pattern.permute.xlu0 0
        %915 = vperm.xlu0 %914, %v879
        %v916 = vpop.permute.xlu0 %915
        %v917 = vperm.slane %v916, %v740
        %v918 = vsel %vm764, %v917, 0
        %920 = vmatpush.msra.mxu0 0.0
        %921 = vmatpush.msra.mxu0 0.0
        %922 = vmatpush.msra.mxu0 0.0
        %923 = vmatpush.msra.mxu0 0.0
        %924 = vmatpush.msra.mxu0 0.0
        %925 = vmatpush.msra.mxu0 0.0
        %926 = vmatpush.msra.mxu0 0.0
        %927 = vmatpush.msra.mxu0 0.0
        %928 = vmatpush.msra.mxu0 0.0
        %929 = vmatpush.msra.mxu0 0.0
        %930 = vmatpush.msra.mxu0 0.0
        %931 = vmatpush.msra.mxu0 0.0
        %932 = vmatpush.msra.mxu0 0.0
        %933 = vmatpush.msra.mxu0 0.0
        %934 = vmatpush.msra.mxu0 0.0
        %935 = vmatpush.msra.mxu0 %v507
        %936 = vmatmul.f32.gmra.mxu0 %v918
        %v937 = vpop.f32.mrf.mxu0
        %v938 = vadd.f32 0.0, %v937
        %939 = vdwg.mxu0
        %941 = vset.pattern.permute.xlu0 0
        %942 = vperm.xlu0 %941, %v880
        %v943 = vpop.permute.xlu0 %942
        %v944 = vperm.slane %v943, %v740
        %v945 = vsel %vm764, %v944, 0
        %947 = vmatpush.msra.mxu0 0.0
        %948 = vmatpush.msra.mxu0 0.0
        %949 = vmatpush.msra.mxu0 0.0
        %950 = vmatpush.msra.mxu0 0.0
        %951 = vmatpush.msra.mxu0 0.0
        %952 = vmatpush.msra.mxu0 0.0
        %953 = vmatpush.msra.mxu0 0.0
        %954 = vmatpush.msra.mxu0 0.0
        %955 = vmatpush.msra.mxu0 0.0
        %956 = vmatpush.msra.mxu0 0.0
        %957 = vmatpush.msra.mxu0 0.0
        %958 = vmatpush.msra.mxu0 0.0
        %959 = vmatpush.msra.mxu0 0.0
        %960 = vmatpush.msra.mxu0 0.0
        %961 = vmatpush.msra.mxu0 0.0
        %962 = vmatpush.msra.mxu0 %v508
        %963 = vmatmul.f32.gmra.mxu0 %v945
        %v964 = vpop.f32.mrf.mxu0
        %v965 = vadd.f32 0.0, %v964
        %966 = vdwg.mxu0
        %968 = vset.pattern.permute.xlu0 0
        %969 = vperm.xlu0 %968, %v881
        %v970 = vpop.permute.xlu0 %969
        %v971 = vperm.slane %v970, %v740
        %v972 = vsel %vm764, %v971, 0
        %974 = vmatpush.msra.mxu0 0.0
        %975 = vmatpush.msra.mxu0 0.0
        %976 = vmatpush.msra.mxu0 0.0
        %977 = vmatpush.msra.mxu0 0.0
        %978 = vmatpush.msra.mxu0 0.0
        %979 = vmatpush.msra.mxu0 0.0
        %980 = vmatpush.msra.mxu0 0.0
        %981 = vmatpush.msra.mxu0 0.0
        %982 = vmatpush.msra.mxu0 0.0
        %983 = vmatpush.msra.mxu0 0.0
        %984 = vmatpush.msra.mxu0 0.0
        %985 = vmatpush.msra.mxu0 0.0
        %986 = vmatpush.msra.mxu0 0.0
        %987 = vmatpush.msra.mxu0 0.0
        %988 = vmatpush.msra.mxu0 0.0
        %989 = vmatpush.msra.mxu0 %v509
        %990 = vmatmul.f32.gmra.mxu0 %v972
        %v991 = vpop.f32.mrf.mxu0
        %v992 = vadd.f32 0.0, %v991
        %993 = vdwg.mxu0
        %995 = vset.pattern.permute.xlu0 0
        %996 = vperm.xlu0 %995, %v882
        %v997 = vpop.permute.xlu0 %996
        %v998 = vperm.slane %v997, %v740
        %v999 = vsel %vm764, %v998, 0
        %1001 = vmatpush.msra.mxu0 0.0
        %1002 = vmatpush.msra.mxu0 0.0
        %1003 = vmatpush.msra.mxu0 0.0
        %1004 = vmatpush.msra.mxu0 0.0
        %1005 = vmatpush.msra.mxu0 0.0
        %1006 = vmatpush.msra.mxu0 0.0
        %1007 = vmatpush.msra.mxu0 0.0
        %1008 = vmatpush.msra.mxu0 0.0
        %1009 = vmatpush.msra.mxu0 0.0
        %1010 = vmatpush.msra.mxu0 0.0
        %1011 = vmatpush.msra.mxu0 0.0
        %1012 = vmatpush.msra.mxu0 0.0
        %1013 = vmatpush.msra.mxu0 0.0
        %1014 = vmatpush.msra.mxu0 0.0
        %1015 = vmatpush.msra.mxu0 0.0
        %1016 = vmatpush.msra.mxu0 %v510
        %1017 = vmatmul.f32.gmra.mxu0 %v999
        %v1018 = vpop.f32.mrf.mxu0
        %v1019 = vadd.f32 0.0, %v1018
        %1020 = vdwg.mxu0
        %1022 = vset.pattern.permute.xlu0 0
        %1023 = vperm.xlu0 %1022, %v883
        %v1024 = vpop.permute.xlu0 %1023
        %v1025 = vperm.slane %v1024, %v740
        %v1026 = vsel %vm764, %v1025, 0
        %1028 = vmatpush.msra.mxu0 0.0
        %1029 = vmatpush.msra.mxu0 0.0
        %1030 = vmatpush.msra.mxu0 0.0
        %1031 = vmatpush.msra.mxu0 0.0
        %1032 = vmatpush.msra.mxu0 0.0
        %1033 = vmatpush.msra.mxu0 0.0
        %1034 = vmatpush.msra.mxu0 0.0
        %1035 = vmatpush.msra.mxu0 0.0
        %1036 = vmatpush.msra.mxu0 0.0
        %1037 = vmatpush.msra.mxu0 0.0
        %1038 = vmatpush.msra.mxu0 0.0
        %1039 = vmatpush.msra.mxu0 0.0
        %1040 = vmatpush.msra.mxu0 0.0
        %1041 = vmatpush.msra.mxu0 0.0
        %1042 = vmatpush.msra.mxu0 0.0
        %1043 = vmatpush.msra.mxu0 %v511
        %1044 = vmatmul.f32.gmra.mxu0 %v1026
        %v1045 = vpop.f32.mrf.mxu0
        %v1046 = vadd.f32 0.0, %v1045
        %1047 = vdwg.mxu0
        %1049 = vset.pattern.permute.xlu0 0
        %1050 = vperm.xlu0 %1049, %v884
        %v1051 = vpop.permute.xlu0 %1050
        %v1052 = vperm.slane %v1051, %v740
        %v1053 = vsel %vm764, %v1052, 0
        %1055 = vmatpush.msra.mxu0 0.0
        %1056 = vmatpush.msra.mxu0 0.0
        %1057 = vmatpush.msra.mxu0 0.0
        %1058 = vmatpush.msra.mxu0 0.0
        %1059 = vmatpush.msra.mxu0 0.0
        %1060 = vmatpush.msra.mxu0 0.0
        %1061 = vmatpush.msra.mxu0 0.0
        %1062 = vmatpush.msra.mxu0 0.0
        %1063 = vmatpush.msra.mxu0 0.0
        %1064 = vmatpush.msra.mxu0 0.0
        %1065 = vmatpush.msra.mxu0 0.0
        %1066 = vmatpush.msra.mxu0 0.0
        %1067 = vmatpush.msra.mxu0 0.0
        %1068 = vmatpush.msra.mxu0 0.0
        %1069 = vmatpush.msra.mxu0 0.0
        %1070 = vmatpush.msra.mxu0 %v512
        %1071 = vmatmul.f32.gmra.mxu0 %v1053
        %v1072 = vpop.f32.mrf.mxu0
        %v1073 = vadd.f32 0.0, %v1072
        %1074 = vdwg.mxu0
        %1076 = vset.pattern.permute.xlu0 0
        %1077 = vperm.xlu0 %1076, %v885
        %v1078 = vpop.permute.xlu0 %1077
        %v1079 = vperm.slane %v1078, %v740
        %v1080 = vsel %vm764, %v1079, 0
        %1082 = vmatpush.msra.mxu0 0.0
        %1083 = vmatpush.msra.mxu0 0.0
        %1084 = vmatpush.msra.mxu0 0.0
        %1085 = vmatpush.msra.mxu0 0.0
        %1086 = vmatpush.msra.mxu0 0.0
        %1087 = vmatpush.msra.mxu0 0.0
        %1088 = vmatpush.msra.mxu0 0.0
        %1089 = vmatpush.msra.mxu0 0.0
        %1090 = vmatpush.msra.mxu0 0.0
        %1091 = vmatpush.msra.mxu0 0.0
        %1092 = vmatpush.msra.mxu0 0.0
        %1093 = vmatpush.msra.mxu0 0.0
        %1094 = vmatpush.msra.mxu0 0.0
        %1095 = vmatpush.msra.mxu0 0.0
        %1096 = vmatpush.msra.mxu0 0.0
        %1097 = vmatpush.msra.mxu0 %v513
        %1098 = vmatmul.f32.gmra.mxu0 %v1080
        %v1099 = vpop.f32.mrf.mxu0
        %v1100 = vadd.f32 0.0, %v1099
        %1101 = vdwg.mxu0
        %v1110 = vrot.slane %v938, 7
        %v1111 = vsel %vm749, %v1110, %v911
        %v1112 = vrot.slane %v965, 6
        %v1113 = vsel %vm751, %v1112, %v1111
        %v1114 = vrot.slane %v992, 5
        %v1115 = vsel %vm753, %v1114, %v1113
        %v1116 = vrot.slane %v1019, 4
        %v1117 = vsel %vm755, %v1116, %v1115
        %v1118 = vrot.slane %v1046, 3
        %v1119 = vsel %vm757, %v1118, %v1117
        %v1120 = vrot.slane %v1073, 2
        %v1121 = vsel %vm759, %v1120, %v1119
        %v1122 = vrot.slane %v1100, 1
        %v1123 = vsel %vm761, %v1122, %v1121
        %1125 = vst.msk [vmem:[%s504] sm:$0xff] %vm523, %v1123
        %s1126 = sand.u32 %s265, 1
        %s1127 = scalar_lea.sflag [#allocation4], %s1126
        %s1128 = sand.u32 %s265, 1
        %s1129 = smul.addr %s1128, 8
        %s1130 = scalar_lea.vmem [#allocation13], %s1129
        // Predicated region
        $region85: #{tpu_custom_call.1} parent=59 // pred_check
          %p1131 = pneg %p275
        $region86: #{tpu_custom_call.1} parent=59 // pred_check_branch
          %1133 = sbr.rel (%p1131) target = $region88
        $region87: #{tpu_custom_call.1} parent=59 // pred_region
          %1135 = vsyncadd %s1127, 0
          %s1136 = smul.addr %s32, 8
          %s1137 = scalar_lea.hbm %s10, %s1136
          %s1139 = sshll.u32 %s1130, 4
          %s1140 = int_to_ptr.vmem [resolvable:$true] %s1139
          %s1141 = sshll.u32 %s1137, 4
          %s1142 = int_to_ptr.hbm [resolvable:$true] %s1141
          %1144 = dma.vmem_to_hbm [thread:$0]  %s1140, 128, %s1142, %s1127
        $region88: #{tpu_custom_call.1} parent=59 // pred_fallthru
          _
      $region60: #{tpu_custom_call.1} parent=5 // pred_fallthru
        _
      %p1145 = scmp.le.s32.totalorder 2, %s27
      // Predicated region
      $region89: #{tpu_custom_call.1} parent=5 // pred_check
        %p1146 = pneg %p1145
      $region90: #{tpu_custom_call.1} parent=5 // pred_check_branch
        %1148 = sbr.rel (%p1146) target = $region92
      $region91: #{tpu_custom_call.1} parent=5 // pred_region
        %s1149 = ssub.s32 %s27, 2
        // Predicated region
        $region93: #{tpu_custom_call.1} parent=91 // pred_check
          %p1150 = pneg %p281
        $region94: #{tpu_custom_call.1} parent=91 // pred_check_branch
          %1152 = sbr.rel (%p1150) target = $region96
        $region95: #{tpu_custom_call.1} parent=91 // pred_region
          %s1153 = sand.u32 %s266, 1
          %s1154 = scalar_lea.sflag [#allocation4], %s1153
          %s1155 = sand.u32 %s266, 1
          %s1156 = smul.addr %s1155, 8
          %s1157 = scalar_lea.vmem [#allocation13], %s1156
          %1159 = dma.done %s1154, 128
        $region96: #{tpu_custom_call.1} parent=91 // pred_fallthru
          _
      $region92: #{tpu_custom_call.1} parent=5 // pred_fallthru
        _
    $region6: #{tpu_custom_call.1} parent=1 // loop_footer
      %s31 = sadd.s32 1, %s27
    $region7: #{tpu_custom_call.1} parent=1 // loop_footer_branch
      %26 = sbr.rel target = $region3
    $region8: #{tpu_custom_call.1} parent=1 // loop_exit
      _
    %1160 = vsyncpa [#allocation3], 1
    %s1161 = scalar_lea.sflag [#allocation3], 1
    %1162 = vsyncpa %s1161, 1
    %1163 = vsyncpa [#allocation6], 1
    %s1164 = scalar_lea.sflag [#allocation6], 1
    %1165 = vsyncpa %s1164, 1
    %1166 = vsyncpa [#allocation9], 1
    %1167 = vsyncpa [#allocation12], 1
    %1168 = vsyncpa [#allocation4], 1
    %s1169 = scalar_lea.sflag [#allocation4], 1
    %1170 = vsyncpa %s1169, 1

</llo_original>
